<compile_context>
chip_gen: v6e
topology: v6e:2x2x1
jax: 0.10.0
libtpu: 0.0.40
codegen_flags: <defaults>
</compile_context>

<pallas_src>
import functools

import jax
import jax.numpy as jnp
from jax.experimental import pallas as pl

# ----------------------------- model hyper-params -----------------------------
BATCH = 2
SEQ_LEN = 8          # Conv1d in-channels
EMBED_DIM = 32       # embedding_dim (Conv1d "length" axis)
ATTN_DIM = 64        # attn_embed_dim
N_HEADS = 2
N_CLASSES = 8


# --------------------------------- kernel -------------------------------------
def mha_small_kernel(x_ref, cw_ref, wproj_ref, bproj_ref, wcls_ref, bcls_ref,
                     out_ref, *, nh, seq_len):
    x = x_ref[...]                       # (B*S, D)   all batches, flattened
    cw = cw_ref[...]                     # (B, B*S)   block-diagonal conv weight
    B, BS = cw.shape
    hd = wcls_ref.shape[1]
    scale = 1.0 / float(hd) ** 0.5

    # ---- in_proj_q Conv1d (seq -> 1), folded per-batch into one matmul: (B, D) ----
    q0 = jnp.dot(cw, x, preferred_element_type=jnp.float32)

    # ---- validity mask: score column c = b*S + s only belongs to batch row b ----
    col = jax.lax.broadcasted_iota(jnp.int32, (B, BS), 1)
    row = jax.lax.broadcasted_iota(jnp.int32, (B, BS), 0)
    valid = (col >= row * seq_len) & (col < (row + 1) * seq_len)

    logits = bcls_ref[...]               # (1, C) -> broadcasts to (B, C) below

    for h in range(nh):                  # static unroll (nh = 2)
        wq, bq = wproj_ref[h],          bproj_ref[h]            # (D, hd), (1, hd)
        wk, bk = wproj_ref[nh + h],     bproj_ref[nh + h]
        wv, bv = wproj_ref[2 * nh + h], bproj_ref[2 * nh + h]

        qh = (jnp.dot(q0, wq, preferred_element_type=jnp.float32) + bq) * scale   # (B, hd)
        kh = jnp.dot(x, wk, preferred_element_type=jnp.float32) + bk              # (B*S, hd)
        vh = jnp.dot(x, wv, preferred_element_type=jnp.float32) + bv              # (B*S, hd)

        # scores over all rows, then mask out cross-batch entries
        s = jax.lax.dot_general(qh, kh, (((1,), (1,)), ((), ())),
                                preferred_element_type=jnp.float32)                # (B, B*S)
        s = jnp.where(valid, s, -1e30)
        m = jnp.max(s, axis=-1, keepdims=True)
        p = jnp.exp(s - m)
        denom = jnp.sum(p, axis=-1, keepdims=True)
        attn = p * pl.reciprocal(denom, approx=True)             # EUP reciprocal (free slot)
        ctx = jnp.dot(attn, vh, preferred_element_type=jnp.float32)               # (B, hd)

        # out_proj + classifier folded & pre-split per head: no concat needed
        logits = logits + jnp.dot(ctx, wcls_ref[h], preferred_element_type=jnp.float32)

    out_ref[...] = logits                # single (B, C) store


# --------------------------------- wrapper ------------------------------------
def mha_small_forward(x, params, *, nh=N_HEADS):
    B, S, D = x.shape
    E = params["wq1"].shape[1]
    hd = E // nh
    C = params["wc"].shape[1]

    # ---- fold the projection chains (host/XLA-side constant precompute) ----
    wq = params["wq1"] @ params["wqi"]                                           # (D, E)
    bq = (params["bq1"] @ params["wqi"] + params["bqi"]
          + params["cb"][0, 0] * jnp.sum(wq, axis=0, keepdims=True))             # (1, E)
    wk = params["wkv"][:, :E] @ params["wki"]                                    # (D, E)
    bk = params["bkv"][:, :E] @ params["wki"] + params["bki"]                    # (1, E)
    wv = params["wkv"][:, E:] @ params["wvi"]                                    # (D, E)
    bv = params["bkv"][:, E:] @ params["wvi"] + params["bvi"]                    # (1, E)
    wcls = params["wo"] @ params["wc"]                                           # (E, C)
    bcls = params["bo"] @ params["wc"] + params["bc"]                            # (1, C)

    # ---- per-head pre-split + pack into a handful of arrays ----
    def heads_w(w):   # (D, E) -> (nh, D, hd)
        return w.reshape(D, nh, hd).transpose(1, 0, 2)

    def heads_b(b):   # (1, E) -> (nh, 1, hd)
        return b.reshape(1, nh, hd).transpose(1, 0, 2)

    w_proj = jnp.concatenate([heads_w(wq), heads_w(wk), heads_w(wv)], axis=0)    # (3*nh, D, hd)
    b_proj = jnp.concatenate([heads_b(bq), heads_b(bk), heads_b(bv)], axis=0)    # (3*nh, 1, hd)
    w_cls = wcls.reshape(nh, hd, C)                                              # (nh, hd, C)

    # block-diagonal Conv1d weight: row b applies cw to batch b's rows of x_flat
    cw_big = jnp.kron(jnp.eye(B, dtype=x.dtype), params["cw"])                   # (B, B*S)

    x_flat = x.reshape(B * S, D)

    kernel = functools.partial(mha_small_kernel, nh=nh, seq_len=S)
    # Single step, no grid: every operand lives whole in VMEM (total < 200 KB).
    logits = pl.pallas_call(
        kernel,
        out_shape=jax.ShapeDtypeStruct((B, C), jnp.float32),
    )(x_flat, cw_big, w_proj, b_proj, w_cls, bcls)
    return logits                                                                # (B, C)


# -------------------------- pure-JAX reference (check) -------------------------
def mha_small_reference(x, p, *, nh=N_HEADS):
    B, S, D = x.shape
    E = p["wq1"].shape[1]
    q0 = jnp.einsum("s,bsd->bd", p["cw"][0], x) + p["cb"][0, 0]
    q = q0 @ p["wq1"] + p["bq1"][0]
    kv = x @ p["wkv"] + p["bkv"][0]
    k, v = kv[..., :E], kv[..., E:]
    qi = q @ p["wqi"] + p["bqi"][0]
    ki = k @ p["wki"] + p["bki"][0]
    vi = v @ p["wvi"] + p["bvi"][0]
    hd = E // nh
    qi = qi.reshape(B, nh, hd) / jnp.sqrt(hd)
    ki = ki.reshape(B, S, nh, hd)
    vi = vi.reshape(B, S, nh, hd)
    scores = jnp.einsum("bhd,bshd->bhs", qi, ki)
    attn = jax.nn.softmax(scores, axis=-1)
    ctx = jnp.einsum("bhs,bshd->bhd", attn, vi).reshape(B, E)
    out = ctx @ p["wo"] + p["bo"][0]
    return out @ p["wc"] + p["bc"][0]


# ----------------------------- deterministic init ------------------------------
def init_params(key, *, seq_len=SEQ_LEN, d=EMBED_DIM, e=ATTN_DIM, c=N_CLASSES):
    ks = jax.random.split(key, 16)
    n = lambda k, shape, s=0.1: (s * jax.random.normal(k, shape)).astype(jnp.float32)
    return {
        # Conv1d(seq_len, 1, 1): weight (1, seq_len, 1) -> (1, seq_len); bias (1,) -> (1,1)
        "cw":  n(ks[0], (1, seq_len)),
        "cb":  n(ks[1], (1, 1)),
        # Linear(D, E) of in_proj_q (transposed)
        "wq1": n(ks[2], (d, e)),
        "bq1": n(ks[3], (1, e)),
        # in_proj_kv: Linear(D, 2E) (transposed)
        "wkv": n(ks[4], (d, 2 * e)),
        "bkv": n(ks[5], (1, 2 * e)),
        # MHA in_proj (q/k/v slices of in_proj_weight, transposed)
        "wqi": n(ks[6], (e, e)),
        "bqi": n(ks[7], (1, e)),
        "wki": n(ks[8], (e, e)),
        "bki": n(ks[9], (1, e)),
        "wvi": n(ks[10], (e, e)),
        "bvi": n(ks[11], (1, e)),
        # MHA out_proj (transposed)
        "wo":  n(ks[12], (e, e)),
        "bo":  n(ks[13], (1, e)),
        # classifier (transposed)
        "wc":  n(ks[14], (e, c)),
        "bc":  n(ks[15], (1, c)),
    }


if __name__ == "__main__":
    key = jax.random.PRNGKey(0)
    kx, kp = jax.random.split(key)
    x = jax.random.normal(kx, (BATCH, SEQ_LEN, EMBED_DIM), dtype=jnp.float32)
    params = init_params(kp)

    logits = jax.block_until_ready(mha_small_forward(x, params))
    ref = mha_small_reference(x, params)

    assert logits.shape == (BATCH, N_CLASSES), logits.shape
    # Tolerance slightly relaxed vs. 1e-4: wrapper-side weight folding reassociates f32 sums
    # and pl.reciprocal(approx=True) carries ~1e-4 relative error in the softmax normalizer
    # (typical observed error is still ~1e-4 absolute).
    assert jnp.allclose(logits, ref, atol=1e-3, rtol=1e-2), (
        f"max abs err = {jnp.max(jnp.abs(logits - ref))}")
    print("KERNEL_OK")
</pallas_src>

<mosaic_0001>
module attributes {stable_mosaic.version = 11 : i64} {
  func.func @mha_small_kernel(%arg0: memref<16x32xf32, #tpu.memory_space<vmem>>, %arg1: memref<2x16xf32, #tpu.memory_space<vmem>>, %arg2: memref<6x32x32xf32, #tpu.memory_space<vmem>>, %arg3: memref<6x1x32xf32, #tpu.memory_space<vmem>>, %arg4: memref<2x32x8xf32, #tpu.memory_space<vmem>>, %arg5: memref<1x8xf32, #tpu.memory_space<vmem>>, %arg6: memref<2x8xf32, #tpu.memory_space<vmem>>) attributes {dimension_semantics = [], scalar_prefetch = 0 : i64, scratch_operands = 0 : i64, tpu.core_type = #tpu.core_type<tc>} {
    %c0 = arith.constant 0 : index
    %c0_0 = arith.constant 0 : index
    %0 = vector.load %arg0[%c0, %c0_0] : memref<16x32xf32, #tpu.memory_space<vmem>>, vector<16x32xf32>
    %c0_1 = arith.constant 0 : index
    %c0_2 = arith.constant 0 : index
    %1 = vector.load %arg1[%c0_1, %c0_2] : memref<2x16xf32, #tpu.memory_space<vmem>>, vector<2x16xf32>
    %cst = arith.constant dense<0.000000e+00> : vector<2x32xf32>
    %2 = tpu.matmul %1, %0, %cst {dimension_numbers = #tpu.dot_dimension_numbers<[1], [0], [0], [1], [0, 0, 1, 1], [], []>} : vector<2x16xf32>, vector<16x32xf32>, vector<2x32xf32> -> vector<2x32xf32>
    %3 = tpu.iota {dimensions = array<i32: 1>} : vector<2x16xi32>
    %4 = tpu.iota {dimensions = array<i32: 0>} : vector<2x16xi32>
    %c8_i32 = arith.constant 8 : i32
    %5 = vector.broadcast %c8_i32 : i32 to vector<2x16xi32>
    %6 = arith.muli %4, %5 : vector<2x16xi32>
    %7 = arith.cmpi sge, %3, %6 : vector<2x16xi32>
    %c1_i32 = arith.constant 1 : i32
    %8 = vector.broadcast %c1_i32 : i32 to vector<2x16xi32>
    %9 = arith.addi %4, %8 : vector<2x16xi32>
    %c8_i32_3 = arith.constant 8 : i32
    %10 = vector.broadcast %c8_i32_3 : i32 to vector<2x16xi32>
    %11 = arith.muli %9, %10 : vector<2x16xi32>
    %12 = arith.cmpi slt, %3, %11 : vector<2x16xi32>
    %13 = arith.andi %7, %12 : vector<2x16xi1>
    %c0_4 = arith.constant 0 : index
    %c0_5 = arith.constant 0 : index
    %14 = vector.load %arg5[%c0_4, %c0_5] : memref<1x8xf32, #tpu.memory_space<vmem>>, vector<1x8xf32>
    %c0_6 = arith.constant 0 : index
    %c0_7 = arith.constant 0 : index
    %c0_8 = arith.constant 0 : index
    %15 = vector.load %arg2[%c0_6, %c0_7, %c0_8] : memref<6x32x32xf32, #tpu.memory_space<vmem>>, vector<1x32x32xf32>
    %16 = vector.shape_cast %15 : vector<1x32x32xf32> to vector<32x32xf32>
    %c0_9 = arith.constant 0 : index
    %c0_10 = arith.constant 0 : index
    %c0_11 = arith.constant 0 : index
    %17 = vector.load %arg3[%c0_9, %c0_10, %c0_11] : memref<6x1x32xf32, #tpu.memory_space<vmem>>, vector<1x1x32xf32>
    %18 = vector.shape_cast %17 : vector<1x1x32xf32> to vector<1x32xf32>
    %c2 = arith.constant 2 : index
    %c0_12 = arith.constant 0 : index
    %c0_13 = arith.constant 0 : index
    %19 = vector.load %arg2[%c2, %c0_12, %c0_13] : memref<6x32x32xf32, #tpu.memory_space<vmem>>, vector<1x32x32xf32>
    %20 = vector.shape_cast %19 : vector<1x32x32xf32> to vector<32x32xf32>
    %c2_14 = arith.constant 2 : index
    %c0_15 = arith.constant 0 : index
    %c0_16 = arith.constant 0 : index
    %21 = vector.load %arg3[%c2_14, %c0_15, %c0_16] : memref<6x1x32xf32, #tpu.memory_space<vmem>>, vector<1x1x32xf32>
    %22 = vector.shape_cast %21 : vector<1x1x32xf32> to vector<1x32xf32>
    %c4 = arith.constant 4 : index
    %c0_17 = arith.constant 0 : index
    %c0_18 = arith.constant 0 : index
    %23 = vector.load %arg2[%c4, %c0_17, %c0_18] : memref<6x32x32xf32, #tpu.memory_space<vmem>>, vector<1x32x32xf32>
    %24 = vector.shape_cast %23 : vector<1x32x32xf32> to vector<32x32xf32>
    %c4_19 = arith.constant 4 : index
    %c0_20 = arith.constant 0 : index
    %c0_21 = arith.constant 0 : index
    %25 = vector.load %arg3[%c4_19, %c0_20, %c0_21] : memref<6x1x32xf32, #tpu.memory_space<vmem>>, vector<1x1x32xf32>
    %26 = vector.shape_cast %25 : vector<1x1x32xf32> to vector<1x32xf32>
    %cst_22 = arith.constant dense<0.000000e+00> : vector<2x32xf32>
    %27 = tpu.matmul %2, %16, %cst_22 {dimension_numbers = #tpu.dot_dimension_numbers<[1], [0], [0], [1], [0, 0, 1, 1], [], []>} : vector<2x32xf32>, vector<32x32xf32>, vector<2x32xf32> -> vector<2x32xf32>
    %28 = vector.broadcast %18 : vector<1x32xf32> to vector<2x32xf32>
    %29 = arith.addf %27, %28 : vector<2x32xf32>
    %cst_23 = arith.constant 0.176776692 : f32
    %30 = vector.broadcast %cst_23 : f32 to vector<2x32xf32>
    %31 = arith.mulf %29, %30 : vector<2x32xf32>
    %cst_24 = arith.constant dense<0.000000e+00> : vector<16x32xf32>
    %32 = tpu.matmul %0, %20, %cst_24 {dimension_numbers = #tpu.dot_dimension_numbers<[1], [0], [0], [1], [0, 0, 1, 1], [], []>} : vector<16x32xf32>, vector<32x32xf32>, vector<16x32xf32> -> vector<16x32xf32>
    %33 = vector.broadcast %22 : vector<1x32xf32> to vector<16x32xf32>
    %34 = arith.addf %32, %33 : vector<16x32xf32>
    %cst_25 = arith.constant dense<0.000000e+00> : vector<16x32xf32>
    %35 = tpu.matmul %0, %24, %cst_25 {dimension_numbers = #tpu.dot_dimension_numbers<[1], [0], [0], [1], [0, 0, 1, 1], [], []>} : vector<16x32xf32>, vector<32x32xf32>, vector<16x32xf32> -> vector<16x32xf32>
    %36 = vector.broadcast %26 : vector<1x32xf32> to vector<16x32xf32>
    %37 = arith.addf %35, %36 : vector<16x32xf32>
    %cst_26 = arith.constant dense<0.000000e+00> : vector<2x16xf32>
    %38 = tpu.matmul %31, %34, %cst_26 {dimension_numbers = #tpu.dot_dimension_numbers<[1], [1], [0], [0], [0, 0, 1, 0], [], []>} : vector<2x32xf32>, vector<16x32xf32>, vector<2x16xf32> -> vector<2x16xf32>
    %cst_27 = arith.constant -1.000000e+30 : f32
    %39 = vector.broadcast %cst_27 : f32 to vector<2x16xf32>
    %40 = arith.select %13, %38, %39 : vector<2x16xi1>, vector<2x16xf32>
    %cst_28 = arith.constant dense<0xFF800000> : vector<2xf32>
    %41 = vector.multi_reduction <maximumf>, %40, %cst_28 [1] : vector<2x16xf32> to vector<2xf32>
    %42 = vector.shape_cast %41 : vector<2xf32> to vector<2x1xf32>
    %43 = vector.broadcast %42 : vector<2x1xf32> to vector<2x16xf32>
    %44 = arith.subf %40, %43 : vector<2x16xf32>
    %45 = math.exp %44 : vector<2x16xf32>
    %cst_29 = arith.constant dense<0.000000e+00> : vector<2xf32>
    %46 = vector.multi_reduction <add>, %45, %cst_29 [1] : vector<2x16xf32> to vector<2xf32>
    %47 = vector.shape_cast %46 : vector<2xf32> to vector<2x1xf32>
    %48 = tpu.reciprocal %47 {approx = true} : vector<2x1xf32> -> vector<2x1xf32>
    %49 = vector.broadcast %48 : vector<2x1xf32> to vector<2x16xf32>
    %50 = arith.mulf %45, %49 : vector<2x16xf32>
    %cst_30 = arith.constant dense<0.000000e+00> : vector<2x32xf32>
    %51 = tpu.matmul %50, %37, %cst_30 {dimension_numbers = #tpu.dot_dimension_numbers<[1], [0], [0], [1], [0, 0, 1, 1], [], []>} : vector<2x16xf32>, vector<16x32xf32>, vector<2x32xf32> -> vector<2x32xf32>
    %c0_31 = arith.constant 0 : index
    %c0_32 = arith.constant 0 : index
    %c0_33 = arith.constant 0 : index
    %52 = vector.load %arg4[%c0_31, %c0_32, %c0_33] : memref<2x32x8xf32, #tpu.memory_space<vmem>>, vector<1x32x8xf32>
    %53 = vector.shape_cast %52 : vector<1x32x8xf32> to vector<32x8xf32>
    %cst_34 = arith.constant dense<0.000000e+00> : vector<2x8xf32>
    %54 = tpu.matmul %51, %53, %cst_34 {dimension_numbers = #tpu.dot_dimension_numbers<[1], [0], [0], [1], [0, 0, 1, 1], [], []>} : vector<2x32xf32>, vector<32x8xf32>, vector<2x8xf32> -> vector<2x8xf32>
    %55 = vector.broadcast %14 : vector<1x8xf32> to vector<2x8xf32>
    %56 = arith.addf %55, %54 : vector<2x8xf32>
    %c1 = arith.constant 1 : index
    %c0_35 = arith.constant 0 : index
    %c0_36 = arith.constant 0 : index
    %57 = vector.load %arg2[%c1, %c0_35, %c0_36] : memref<6x32x32xf32, #tpu.memory_space<vmem>>, vector<1x32x32xf32>
    %58 = vector.shape_cast %57 : vector<1x32x32xf32> to vector<32x32xf32>
    %c1_37 = arith.constant 1 : index
    %c0_38 = arith.constant 0 : index
    %c0_39 = arith.constant 0 : index
    %59 = vector.load %arg3[%c1_37, %c0_38, %c0_39] : memref<6x1x32xf32, #tpu.memory_space<vmem>>, vector<1x1x32xf32>
    %60 = vector.shape_cast %59 : vector<1x1x32xf32> to vector<1x32xf32>
    %c3 = arith.constant 3 : index
    %c0_40 = arith.constant 0 : index
    %c0_41 = arith.constant 0 : index
    %61 = vector.load %arg2[%c3, %c0_40, %c0_41] : memref<6x32x32xf32, #tpu.memory_space<vmem>>, vector<1x32x32xf32>
    %62 = vector.shape_cast %61 : vector<1x32x32xf32> to vector<32x32xf32>
    %c3_42 = arith.constant 3 : index
    %c0_43 = arith.constant 0 : index
    %c0_44 = arith.constant 0 : index
    %63 = vector.load %arg3[%c3_42, %c0_43, %c0_44] : memref<6x1x32xf32, #tpu.memory_space<vmem>>, vector<1x1x32xf32>
    %64 = vector.shape_cast %63 : vector<1x1x32xf32> to vector<1x32xf32>
    %c5 = arith.constant 5 : index
    %c0_45 = arith.constant 0 : index
    %c0_46 = arith.constant 0 : index
    %65 = vector.load %arg2[%c5, %c0_45, %c0_46] : memref<6x32x32xf32, #tpu.memory_space<vmem>>, vector<1x32x32xf32>
    %66 = vector.shape_cast %65 : vector<1x32x32xf32> to vector<32x32xf32>
    %c5_47 = arith.constant 5 : index
    %c0_48 = arith.constant 0 : index
    %c0_49 = arith.constant 0 : index
    %67 = vector.load %arg3[%c5_47, %c0_48, %c0_49] : memref<6x1x32xf32, #tpu.memory_space<vmem>>, vector<1x1x32xf32>
    %68 = vector.shape_cast %67 : vector<1x1x32xf32> to vector<1x32xf32>
    %cst_50 = arith.constant dense<0.000000e+00> : vector<2x32xf32>
    %69 = tpu.matmul %2, %58, %cst_50 {dimension_numbers = #tpu.dot_dimension_numbers<[1], [0], [0], [1], [0, 0, 1, 1], [], []>} : vector<2x32xf32>, vector<32x32xf32>, vector<2x32xf32> -> vector<2x32xf32>
    %70 = vector.broadcast %60 : vector<1x32xf32> to vector<2x32xf32>
    %71 = arith.addf %69, %70 : vector<2x32xf32>
    %cst_51 = arith.constant 0.176776692 : f32
    %72 = vector.broadcast %cst_51 : f32 to vector<2x32xf32>
    %73 = arith.mulf %71, %72 : vector<2x32xf32>
    %cst_52 = arith.constant dense<0.000000e+00> : vector<16x32xf32>
    %74 = tpu.matmul %0, %62, %cst_52 {dimension_numbers = #tpu.dot_dimension_numbers<[1], [0], [0], [1], [0, 0, 1, 1], [], []>} : vector<16x32xf32>, vector<32x32xf32>, vector<16x32xf32> -> vector<16x32xf32>
    %75 = vector.broadcast %64 : vector<1x32xf32> to vector<16x32xf32>
    %76 = arith.addf %74, %75 : vector<16x32xf32>
    %cst_53 = arith.constant dense<0.000000e+00> : vector<16x32xf32>
    %77 = tpu.matmul %0, %66, %cst_53 {dimension_numbers = #tpu.dot_dimension_numbers<[1], [0], [0], [1], [0, 0, 1, 1], [], []>} : vector<16x32xf32>, vector<32x32xf32>, vector<16x32xf32> -> vector<16x32xf32>
    %78 = vector.broadcast %68 : vector<1x32xf32> to vector<16x32xf32>
    %79 = arith.addf %77, %78 : vector<16x32xf32>
    %cst_54 = arith.constant dense<0.000000e+00> : vector<2x16xf32>
    %80 = tpu.matmul %73, %76, %cst_54 {dimension_numbers = #tpu.dot_dimension_numbers<[1], [1], [0], [0], [0, 0, 1, 0], [], []>} : vector<2x32xf32>, vector<16x32xf32>, vector<2x16xf32> -> vector<2x16xf32>
    %cst_55 = arith.constant -1.000000e+30 : f32
    %81 = vector.broadcast %cst_55 : f32 to vector<2x16xf32>
    %82 = arith.select %13, %80, %81 : vector<2x16xi1>, vector<2x16xf32>
    %cst_56 = arith.constant dense<0xFF800000> : vector<2xf32>
    %83 = vector.multi_reduction <maximumf>, %82, %cst_56 [1] : vector<2x16xf32> to vector<2xf32>
    %84 = vector.shape_cast %83 : vector<2xf32> to vector<2x1xf32>
    %85 = vector.broadcast %84 : vector<2x1xf32> to vector<2x16xf32>
    %86 = arith.subf %82, %85 : vector<2x16xf32>
    %87 = math.exp %86 : vector<2x16xf32>
    %cst_57 = arith.constant dense<0.000000e+00> : vector<2xf32>
    %88 = vector.multi_reduction <add>, %87, %cst_57 [1] : vector<2x16xf32> to vector<2xf32>
    %89 = vector.shape_cast %88 : vector<2xf32> to vector<2x1xf32>
    %90 = tpu.reciprocal %89 {approx = true} : vector<2x1xf32> -> vector<2x1xf32>
    %91 = vector.broadcast %90 : vector<2x1xf32> to vector<2x16xf32>
    %92 = arith.mulf %87, %91 : vector<2x16xf32>
    %cst_58 = arith.constant dense<0.000000e+00> : vector<2x32xf32>
    %93 = tpu.matmul %92, %79, %cst_58 {dimension_numbers = #tpu.dot_dimension_numbers<[1], [0], [0], [1], [0, 0, 1, 1], [], []>} : vector<2x16xf32>, vector<16x32xf32>, vector<2x32xf32> -> vector<2x32xf32>
    %c1_59 = arith.constant 1 : index
    %c0_60 = arith.constant 0 : index
    %c0_61 = arith.constant 0 : index
    %94 = vector.load %arg4[%c1_59, %c0_60, %c0_61] : memref<2x32x8xf32, #tpu.memory_space<vmem>>, vector<1x32x8xf32>
    %95 = vector.shape_cast %94 : vector<1x32x8xf32> to vector<32x8xf32>
    %cst_62 = arith.constant dense<0.000000e+00> : vector<2x8xf32>
    %96 = tpu.matmul %93, %95, %cst_62 {dimension_numbers = #tpu.dot_dimension_numbers<[1], [0], [0], [1], [0, 0, 1, 1], [], []>} : vector<2x32xf32>, vector<32x8xf32>, vector<2x8xf32> -> vector<2x8xf32>
    %97 = arith.addf %56, %96 : vector<2x8xf32>
    %c0_63 = arith.constant 0 : index
    %c0_64 = arith.constant 0 : index
    %98 = vector.load %arg6[%c0_63, %c0_64] : memref<2x8xf32, #tpu.memory_space<vmem>>, vector<2x8xf32>
    tpu.vector_store %arg6[%c0_63, %c0_64], %97 {strides = array<i32>} : memref<2x8xf32, #tpu.memory_space<vmem>>, vector<2x8xf32>,
    return
  }
}

</mosaic_0001>

<llo_original>
// kernel: tpu_custom_call.1
$region0: #{tpu_custom_call.1}
  #allocation0 [shape = 'u32[]', space=smem, size = 0x4, offset = 0x4, fixed_abs, tag = 'smem constant byte address 0x4 - core index']
  #allocation1 [shape = 'u32[144,128]{1,0:T(1,128)}', space=vmem, size = 0x12000, scoped, tag = 'internal scratch']
  %s0 = inlined_call_operand.vmem [shape: f32[16,32], index: 0, kind: input, shape index: {}]
  %s1 = inlined_call_operand.vmem [shape: f32[2,16], index: 1, kind: input, shape index: {}]
  %s2 = inlined_call_operand.hbm [shape: f32[6,32,32], index: 2, kind: input, shape index: {}]
  %s3 = inlined_call_operand.vmem [shape: f32[6,1,32], index: 3, kind: input, shape index: {}]
  %s4 = inlined_call_operand.vmem [shape: f32[2,32,8], index: 4, kind: input, shape index: {}]
  %s5 = inlined_call_operand.vmem [shape: f32[1,8], index: 5, kind: input, shape index: {}]
  %s6 = inlined_call_operand.hbm [shape: f32[2,8], index: 6, kind: output, shape index: {}]
  %s7 = sld [smem:[#allocation0]]
  $region38: #{tpu_custom_call.1} parent=0
    _
  %s9 = ssub.s32 1, %s7
  %s10 = scalar_select 0, %s9, %s7
  $region1: #{tpu_custom_call.1} parent=0
    #allocation2 [shape = 'u8[98304]{0}', space=vmem, size = 0x18000, scoped, tag = 'input window, operand 2, single buffered']
    #allocation3 [shape = 's32[1]{0}', space=sflag, size = 0x4, scoped, tag = 'scoped memory for tpu_custom_call.1']
    #allocation4 [shape = 's32[1]{0}', space=sflag, size = 0x4, scoped, tag = 'scoped memory for tpu_custom_call.1']
    #allocation5 [shape = 'u8[1024]{0}', space=vmem, size = 0x400, scoped, tag = 'output window, operand 0, single buffered']
    %11 = vsyncpa [#allocation3], 0
    %12 = vsyncpa [#allocation4], 0
    // Predicated region
    $region2: #{tpu_custom_call.1} parent=1 // pred_check
      _
    $region3: #{tpu_custom_call.1} parent=1 // pred_check_branch
      %14 = sbr.rel (0) target = $region5
    $region4: #{tpu_custom_call.1} parent=1 // pred_region
      _
    $region5: #{tpu_custom_call.1} parent=1 // pred_fallthru
      _
    // Predicated region
    $region6: #{tpu_custom_call.1} parent=1 // pred_check
      _
    $region7: #{tpu_custom_call.1} parent=1 // pred_check_branch
      %16 = sbr.rel (0) target = $region9
    $region8: #{tpu_custom_call.1} parent=1 // pred_region
      _
    $region9: #{tpu_custom_call.1} parent=1 // pred_fallthru
      _
    // Predicated region
    $region10: #{tpu_custom_call.1} parent=1 // pred_check
      _
    $region11: #{tpu_custom_call.1} parent=1 // pred_check_branch
      %18 = sbr.rel (0) target = $region13
    $region12: #{tpu_custom_call.1} parent=1 // pred_region
      %s20 = ssub.s32 3072, 3072
      %21 = vsyncadd [#allocation3], %s20
      %s22 = sshll.u32 [#allocation2], 4
      %s23 = int_to_ptr.vmem [resolvable:$true] %s22
      %28 = dma.hbm_to_vmem [thread:$0]  %s2, 3072, %s23, [#allocation3], 128, 128, 8
    $region13: #{tpu_custom_call.1} parent=1 // pred_fallthru
      _
    // Predicated region
    $region14: #{tpu_custom_call.1} parent=1 // pred_check
      _
    $region15: #{tpu_custom_call.1} parent=1 // pred_check_branch
      %30 = sbr.rel (0) target = $region17
    $region16: #{tpu_custom_call.1} parent=1 // pred_region
      _
    $region17: #{tpu_custom_call.1} parent=1 // pred_fallthru
      _
    // Predicated region
    $region18: #{tpu_custom_call.1} parent=1 // pred_check
      _
    $region19: #{tpu_custom_call.1} parent=1 // pred_check_branch
      %32 = sbr.rel (0) target = $region21
    $region20: #{tpu_custom_call.1} parent=1 // pred_region
      _
    $region21: #{tpu_custom_call.1} parent=1 // pred_fallthru
      _
    // Predicated region
    $region22: #{tpu_custom_call.1} parent=1 // pred_check
      _
    $region23: #{tpu_custom_call.1} parent=1 // pred_check_branch
      %34 = sbr.rel (0) target = $region25
    $region24: #{tpu_custom_call.1} parent=1 // pred_region
      _
    $region25: #{tpu_custom_call.1} parent=1 // pred_fallthru
      _
    // Predicated region
    $region26: #{tpu_custom_call.1} parent=1 // pred_check
      _
    $region27: #{tpu_custom_call.1} parent=1 // pred_check_branch
      %36 = sbr.rel (0) target = $region29
    $region28: #{tpu_custom_call.1} parent=1 // pred_region
      %37 = dma.done [#allocation3], 3072
    $region29: #{tpu_custom_call.1} parent=1 // pred_fallthru
      _
    %v38 = vld [vmem:[%s0] sm:$0xff]
    %v39 = vld [vmem:[%s0 + $0x8] sm:$0xff]
    %v40 = vld [vmem:[%s1] sm:$0x3]
    %vm41 = vcmask 130048
    %v43 = vsel %vm41, %v40, 0
    %45 = vmatprep.subr.mxu0 0.0
    %46 = vmatpush1.msra.mxu0 0.0
    %47 = vmatprep.subr.mxu0 0.0
    %48 = vmatpush1.msra.mxu0 0.0
    %49 = vmatprep.subr.mxu0 0.0
    %50 = vmatpush1.msra.mxu0 0.0
    %51 = vmatprep.subr.mxu0 0.0
    %52 = vmatpush1.msra.mxu0 0.0
    %53 = vmatprep.subr.mxu0 0.0
    %54 = vmatpush1.msra.mxu0 0.0
    %55 = vmatprep.subr.mxu0 0.0
    %56 = vmatpush1.msra.mxu0 0.0
    %57 = vmatprep.subr.mxu0 0.0
    %58 = vmatpush1.msra.mxu0 0.0
    %59 = vmatprep.subr.mxu0 0.0
    %60 = vmatpush1.msra.mxu0 0.0
    %61 = vmatprep.subr.mxu0 0.0
    %62 = vmatpush1.msra.mxu0 0.0
    %63 = vmatprep.subr.mxu0 0.0
    %64 = vmatpush1.msra.mxu0 0.0
    %65 = vmatprep.subr.mxu0 0.0
    %66 = vmatpush1.msra.mxu0 0.0
    %67 = vmatprep.subr.mxu0 0.0
    %68 = vmatpush1.msra.mxu0 0.0
    %69 = vmatprep.subr.mxu0 0.0
    %70 = vmatpush1.msra.mxu0 0.0
    %71 = vmatprep.subr.mxu0 0.0
    %72 = vmatpush1.msra.mxu0 0.0
    %73 = vmatprep.subr.mxu0 0.0
    %74 = vmatpush1.msra.mxu0 %v39
    %75 = vmatprep.subr.mxu0 0.0
    %76 = vmatpush1.msra.mxu0 %v38
    %77 = vmatprep.subr.mxu0 0.0
    %78 = vmatpush2.msra.mxu0 0.0
    %79 = vmatprep.subr.mxu0 0.0
    %80 = vmatpush2.msra.mxu0 0.0
    %81 = vmatprep.subr.mxu0 0.0
    %82 = vmatpush2.msra.mxu0 0.0
    %83 = vmatprep.subr.mxu0 0.0
    %84 = vmatpush2.msra.mxu0 0.0
    %85 = vmatprep.subr.mxu0 0.0
    %86 = vmatpush2.msra.mxu0 0.0
    %87 = vmatprep.subr.mxu0 0.0
    %88 = vmatpush2.msra.mxu0 0.0
    %89 = vmatprep.subr.mxu0 0.0
    %90 = vmatpush2.msra.mxu0 0.0
    %91 = vmatprep.subr.mxu0 0.0
    %92 = vmatpush2.msra.mxu0 0.0
    %93 = vmatprep.subr.mxu0 0.0
    %94 = vmatpush2.msra.mxu0 0.0
    %95 = vmatprep.subr.mxu0 0.0
    %96 = vmatpush2.msra.mxu0 0.0
    %97 = vmatprep.subr.mxu0 0.0
    %98 = vmatpush2.msra.mxu0 0.0
    %99 = vmatprep.subr.mxu0 0.0
    %100 = vmatpush2.msra.mxu0 0.0
    %101 = vmatprep.subr.mxu0 0.0
    %102 = vmatpush2.msra.mxu0 0.0
    %103 = vmatprep.subr.mxu0 0.0
    %104 = vmatpush2.msra.mxu0 0.0
    %105 = vmatprep.subr.mxu0 0.0
    %106 = vmatpush2.msra.mxu0 0.0
    %107 = vmatprep.subr.mxu0 0.0
    %108 = vmatpush2.msra.mxu0 0.0
    %109 = vmatprep.mubr.f32.mxu0 0.0
    %110 = vmatmul.mubr.f32.gmra.mxu0 %v43
    %v111 = vpop.f32.mrf.mxu0
    %v112 = vadd.f32 0.0, %v111
    %v113 = vpop.f32.mrf.mxu0
    %114 = vdwg.mxu0
    %v115 = vlaneseq
    %v116 = vand.u32 %v115, 127
    %v117 = vlaneseq
    %v118 = vshrl.u32 %v117, 7
    %v119 = vmul.u32 %v118, 8
    %vm120 = vcmp.ge.s32.totalorder %v116, %v119
    %v121 = vadd.s32 %v118, 1
    %v122 = vmul.u32 %v121, 8
    %vm123 = vcmp.lt.s32.totalorder %v116, %v122
    %vm124 = vmand %vm120, %vm123
    %v125 = vld [vmem:[%s5] sm:$0x1]
    %v126 = vld [vmem:[#allocation2] sm:$0xff]
    %v127 = vld [vmem:[#allocation2 + $0x8] sm:$0xff]
    %v128 = vld [vmem:[#allocation2 + $0x10] sm:$0xff]
    %v129 = vld [vmem:[#allocation2 + $0x18] sm:$0xff]
    %v130 = vld [vmem:[%s3] sm:$0x1]
    %s131 = scalar_lea.vmem [#allocation2], 64
    %v132 = vld [vmem:[%s131] sm:$0xff]
    %v133 = vld [vmem:[%s131 + $0x8] sm:$0xff]
    %v134 = vld [vmem:[%s131 + $0x10] sm:$0xff]
    %v135 = vld [vmem:[%s131 + $0x18] sm:$0xff]
    %s136 = scalar_lea.vmem %s3, 2
    %v137 = vld [vmem:[%s136] sm:$0x1]
    %s138 = scalar_lea.vmem [#allocation2], 128
    %v139 = vld [vmem:[%s138] sm:$0xff]
    %v140 = vld [vmem:[%s138 + $0x8] sm:$0xff]
    %v141 = vld [vmem:[%s138 + $0x10] sm:$0xff]
    %v142 = vld [vmem:[%s138 + $0x18] sm:$0xff]
    %s143 = scalar_lea.vmem %s3, 4
    %v144 = vld [vmem:[%s143] sm:$0x1]
    %v146 = vlaneseq
    %v147 = vshrl.u32 %v146, 7
    %v148 = vsub.s32 0, %v147
    %v149 = vrot.slane %v130, %v148
    %vm151 = vcmask 261120
    %v153 = vsel %vm151, %v112, 0
    %155 = vmatprep.subr.mxu0 0.0
    %156 = vmatpush1.msra.mxu0 0.0
    %157 = vmatprep.subr.mxu0 0.0
    %158 = vmatpush1.msra.mxu0 0.0
    %159 = vmatprep.subr.mxu0 0.0
    %160 = vmatpush1.msra.mxu0 0.0
    %161 = vmatprep.subr.mxu0 0.0
    %162 = vmatpush1.msra.mxu0 0.0
    %163 = vmatprep.subr.mxu0 0.0
    %164 = vmatpush1.msra.mxu0 0.0
    %165 = vmatprep.subr.mxu0 0.0
    %166 = vmatpush1.msra.mxu0 0.0
    %167 = vmatprep.subr.mxu0 0.0
    %168 = vmatpush1.msra.mxu0 0.0
    %169 = vmatprep.subr.mxu0 0.0
    %170 = vmatpush1.msra.mxu0 0.0
    %171 = vmatprep.subr.mxu0 0.0
    %172 = vmatpush1.msra.mxu0 0.0
    %173 = vmatprep.subr.mxu0 0.0
    %174 = vmatpush1.msra.mxu0 0.0
    %175 = vmatprep.subr.mxu0 0.0
    %176 = vmatpush1.msra.mxu0 0.0
    %177 = vmatprep.subr.mxu0 0.0
    %178 = vmatpush1.msra.mxu0 0.0
    %179 = vmatprep.subr.mxu0 0.0
    %180 = vmatpush1.msra.mxu0 %v129
    %181 = vmatprep.subr.mxu0 0.0
    %182 = vmatpush1.msra.mxu0 %v128
    %183 = vmatprep.subr.mxu0 0.0
    %184 = vmatpush1.msra.mxu0 %v127
    %185 = vmatprep.subr.mxu0 0.0
    %186 = vmatpush1.msra.mxu0 %v126
    %187 = vmatprep.subr.mxu0 0.0
    %188 = vmatpush2.msra.mxu0 0.0
    %189 = vmatprep.subr.mxu0 0.0
    %190 = vmatpush2.msra.mxu0 0.0
    %191 = vmatprep.subr.mxu0 0.0
    %192 = vmatpush2.msra.mxu0 0.0
    %193 = vmatprep.subr.mxu0 0.0
    %194 = vmatpush2.msra.mxu0 0.0
    %195 = vmatprep.subr.mxu0 0.0
    %196 = vmatpush2.msra.mxu0 0.0
    %197 = vmatprep.subr.mxu0 0.0
    %198 = vmatpush2.msra.mxu0 0.0
    %199 = vmatprep.subr.mxu0 0.0
    %200 = vmatpush2.msra.mxu0 0.0
    %201 = vmatprep.subr.mxu0 0.0
    %202 = vmatpush2.msra.mxu0 0.0
    %203 = vmatprep.subr.mxu0 0.0
    %204 = vmatpush2.msra.mxu0 0.0
    %205 = vmatprep.subr.mxu0 0.0
    %206 = vmatpush2.msra.mxu0 0.0
    %207 = vmatprep.subr.mxu0 0.0
    %208 = vmatpush2.msra.mxu0 0.0
    %209 = vmatprep.subr.mxu0 0.0
    %210 = vmatpush2.msra.mxu0 0.0
    %211 = vmatprep.subr.mxu0 0.0
    %212 = vmatpush2.msra.mxu0 0.0
    %213 = vmatprep.subr.mxu0 0.0
    %214 = vmatpush2.msra.mxu0 0.0
    %215 = vmatprep.subr.mxu0 0.0
    %216 = vmatpush2.msra.mxu0 0.0
    %217 = vmatprep.subr.mxu0 0.0
    %218 = vmatpush2.msra.mxu0 0.0
    %219 = vmatprep.mubr.f32.mxu0 0.0
    %220 = vmatmul.mubr.f32.gmra.mxu0 %v153
    %v221 = vpop.f32.mrf.mxu0
    %v222 = vadd.f32 %v149, %v221
    %v223 = vpop.f32.mrf.mxu0
    %224 = vdwg.mxu0
    %v225 = vmul.f32 %v222, 0.17677669
    %v227 = vlaneseq
    %v228 = vshrl.u32 %v227, 7
    %v229 = vsub.s32 0, %v228
    %v230 = vrot.slane %v137, %v229
    %v233 = vsel %vm151, %v38, 0
    %v236 = vsel %vm151, %v39, 0
    %238 = vmatprep.subr.mxu0 0.0
    %239 = vmatpush1.msra.mxu0 0.0
    %240 = vmatprep.subr.mxu0 0.0
    %241 = vmatpush1.msra.mxu0 0.0
    %242 = vmatprep.subr.mxu0 0.0
    %243 = vmatpush1.msra.mxu0 0.0
    %244 = vmatprep.subr.mxu0 0.0
    %245 = vmatpush1.msra.mxu0 0.0
    %246 = vmatprep.subr.mxu0 0.0
    %247 = vmatpush1.msra.mxu0 0.0
    %248 = vmatprep.subr.mxu0 0.0
    %249 = vmatpush1.msra.mxu0 0.0
    %250 = vmatprep.subr.mxu0 0.0
    %251 = vmatpush1.msra.mxu0 0.0
    %252 = vmatprep.subr.mxu0 0.0
    %253 = vmatpush1.msra.mxu0 0.0
    %254 = vmatprep.subr.mxu0 0.0
    %255 = vmatpush1.msra.mxu0 0.0
    %256 = vmatprep.subr.mxu0 0.0
    %257 = vmatpush1.msra.mxu0 0.0
    %258 = vmatprep.subr.mxu0 0.0
    %259 = vmatpush1.msra.mxu0 0.0
    %260 = vmatprep.subr.mxu0 0.0
    %261 = vmatpush1.msra.mxu0 0.0
    %262 = vmatprep.subr.mxu0 0.0
    %263 = vmatpush1.msra.mxu0 %v135
    %264 = vmatprep.subr.mxu0 0.0
    %265 = vmatpush1.msra.mxu0 %v134
    %266 = vmatprep.subr.mxu0 0.0
    %267 = vmatpush1.msra.mxu0 %v133
    %268 = vmatprep.subr.mxu0 0.0
    %269 = vmatpush1.msra.mxu0 %v132
    %270 = vmatprep.subr.mxu0 0.0
    %271 = vmatpush2.msra.mxu0 0.0
    %272 = vmatprep.subr.mxu0 0.0
    %273 = vmatpush2.msra.mxu0 0.0
    %274 = vmatprep.subr.mxu0 0.0
    %275 = vmatpush2.msra.mxu0 0.0
    %276 = vmatprep.subr.mxu0 0.0
    %277 = vmatpush2.msra.mxu0 0.0
    %278 = vmatprep.subr.mxu0 0.0
    %279 = vmatpush2.msra.mxu0 0.0
    %280 = vmatprep.subr.mxu0 0.0
    %281 = vmatpush2.msra.mxu0 0.0
    %282 = vmatprep.subr.mxu0 0.0
    %283 = vmatpush2.msra.mxu0 0.0
    %284 = vmatprep.subr.mxu0 0.0
    %285 = vmatpush2.msra.mxu0 0.0
    %286 = vmatprep.subr.mxu0 0.0
    %287 = vmatpush2.msra.mxu0 0.0
    %288 = vmatprep.subr.mxu0 0.0
    %289 = vmatpush2.msra.mxu0 0.0
    %290 = vmatprep.subr.mxu0 0.0
    %291 = vmatpush2.msra.mxu0 0.0
    %292 = vmatprep.subr.mxu0 0.0
    %293 = vmatpush2.msra.mxu0 0.0
    %294 = vmatprep.subr.mxu0 0.0
    %295 = vmatpush2.msra.mxu0 0.0
    %296 = vmatprep.subr.mxu0 0.0
    %297 = vmatpush2.msra.mxu0 0.0
    %298 = vmatprep.subr.mxu0 0.0
    %299 = vmatpush2.msra.mxu0 0.0
    %300 = vmatprep.subr.mxu0 0.0
    %301 = vmatpush2.msra.mxu0 0.0
    %302 = vmatprep.mubr.f32.mxu0 0.0
    %303 = vmatmul.mubr.f32.gmra.mxu0 %v233
    %v304 = vpop.f32.mrf.mxu0
    %v305 = vadd.f32 %v230, %v304
    %v306 = vpop.f32.mrf.mxu0
    %307 = vmatprep.mubr.f32.mxu0 0.0
    %308 = vmatmul.mubr.f32.gmra.mxu0 %v236
    %v309 = vpop.f32.mrf.mxu0
    %v310 = vadd.f32 %v230, %v309
    %v311 = vpop.f32.mrf.mxu0
    %312 = vdwg.mxu0
    %v314 = vlaneseq
    %v315 = vshrl.u32 %v314, 7
    %v316 = vsub.s32 0, %v315
    %v317 = vrot.slane %v144, %v316
    %319 = vmatprep.subr.mxu0 0.0
    %320 = vmatpush1.msra.mxu0 0.0
    %321 = vmatprep.subr.mxu0 0.0
    %322 = vmatpush1.msra.mxu0 0.0
    %323 = vmatprep.subr.mxu0 0.0
    %324 = vmatpush1.msra.mxu0 0.0
    %325 = vmatprep.subr.mxu0 0.0
    %326 = vmatpush1.msra.mxu0 0.0
    %327 = vmatprep.subr.mxu0 0.0
    %328 = vmatpush1.msra.mxu0 0.0
    %329 = vmatprep.subr.mxu0 0.0
    %330 = vmatpush1.msra.mxu0 0.0
    %331 = vmatprep.subr.mxu0 0.0
    %332 = vmatpush1.msra.mxu0 0.0
    %333 = vmatprep.subr.mxu0 0.0
    %334 = vmatpush1.msra.mxu0 0.0
    %335 = vmatprep.subr.mxu0 0.0
    %336 = vmatpush1.msra.mxu0 0.0
    %337 = vmatprep.subr.mxu0 0.0
    %338 = vmatpush1.msra.mxu0 0.0
    %339 = vmatprep.subr.mxu0 0.0
    %340 = vmatpush1.msra.mxu0 0.0
    %341 = vmatprep.subr.mxu0 0.0
    %342 = vmatpush1.msra.mxu0 0.0
    %343 = vmatprep.subr.mxu0 0.0
    %344 = vmatpush1.msra.mxu0 %v142
    %345 = vmatprep.subr.mxu0 0.0
    %346 = vmatpush1.msra.mxu0 %v141
    %347 = vmatprep.subr.mxu0 0.0
    %348 = vmatpush1.msra.mxu0 %v140
    %349 = vmatprep.subr.mxu0 0.0
    %350 = vmatpush1.msra.mxu0 %v139
    %351 = vmatprep.subr.mxu0 0.0
    %352 = vmatpush2.msra.mxu0 0.0
    %353 = vmatprep.subr.mxu0 0.0
    %354 = vmatpush2.msra.mxu0 0.0
    %355 = vmatprep.subr.mxu0 0.0
    %356 = vmatpush2.msra.mxu0 0.0
    %357 = vmatprep.subr.mxu0 0.0
    %358 = vmatpush2.msra.mxu0 0.0
    %359 = vmatprep.subr.mxu0 0.0
    %360 = vmatpush2.msra.mxu0 0.0
    %361 = vmatprep.subr.mxu0 0.0
    %362 = vmatpush2.msra.mxu0 0.0
    %363 = vmatprep.subr.mxu0 0.0
    %364 = vmatpush2.msra.mxu0 0.0
    %365 = vmatprep.subr.mxu0 0.0
    %366 = vmatpush2.msra.mxu0 0.0
    %367 = vmatprep.subr.mxu0 0.0
    %368 = vmatpush2.msra.mxu0 0.0
    %369 = vmatprep.subr.mxu0 0.0
    %370 = vmatpush2.msra.mxu0 0.0
    %371 = vmatprep.subr.mxu0 0.0
    %372 = vmatpush2.msra.mxu0 0.0
    %373 = vmatprep.subr.mxu0 0.0
    %374 = vmatpush2.msra.mxu0 0.0
    %375 = vmatprep.subr.mxu0 0.0
    %376 = vmatpush2.msra.mxu0 0.0
    %377 = vmatprep.subr.mxu0 0.0
    %378 = vmatpush2.msra.mxu0 0.0
    %379 = vmatprep.subr.mxu0 0.0
    %380 = vmatpush2.msra.mxu0 0.0
    %381 = vmatprep.subr.mxu0 0.0
    %382 = vmatpush2.msra.mxu0 0.0
    %383 = vmatprep.mubr.f32.mxu0 0.0
    %384 = vmatmul.mubr.f32.gmra.mxu0 %v233
    %v385 = vpop.f32.mrf.mxu0
    %v386 = vadd.f32 %v317, %v385
    %v387 = vpop.f32.mrf.mxu0
    %388 = vmatprep.mubr.f32.mxu0 0.0
    %389 = vmatmul.mubr.f32.gmra.mxu0 %v236
    %v390 = vpop.f32.mrf.mxu0
    %v391 = vadd.f32 %v317, %v390
    %v392 = vpop.f32.mrf.mxu0
    %393 = vdwg.mxu0
    %v395 = vsel %vm151, %v225, 0
    %v398 = vsel %vm151, %v305, 0
    %v401 = vsel %vm151, %v310, 0
    %403 = vmatprep.subr.mxu0 0.0
    %404 = vmatpush1.xpose.msra.mxu0 0.0
    %405 = vmatprep.subr.mxu0 0.0
    %406 = vmatpush1.xpose.msra.mxu0 0.0
    %407 = vmatprep.subr.mxu0 0.0
    %408 = vmatpush1.xpose.msra.mxu0 0.0
    %409 = vmatprep.subr.mxu0 0.0
    %410 = vmatpush1.xpose.msra.mxu0 0.0
    %411 = vmatprep.subr.mxu0 0.0
    %412 = vmatpush1.xpose.msra.mxu0 0.0
    %413 = vmatprep.subr.mxu0 0.0
    %414 = vmatpush1.xpose.msra.mxu0 0.0
    %415 = vmatprep.subr.mxu0 0.0
    %416 = vmatpush1.xpose.msra.mxu0 0.0
    %417 = vmatprep.subr.mxu0 0.0
    %418 = vmatpush1.xpose.msra.mxu0 0.0
    %419 = vmatprep.subr.mxu0 0.0
    %420 = vmatpush1.xpose.msra.mxu0 0.0
    %421 = vmatprep.subr.mxu0 0.0
    %422 = vmatpush1.xpose.msra.mxu0 0.0
    %423 = vmatprep.subr.mxu0 0.0
    %424 = vmatpush1.xpose.msra.mxu0 0.0
    %425 = vmatprep.subr.mxu0 0.0
    %426 = vmatpush1.xpose.msra.mxu0 0.0
    %427 = vmatprep.subr.mxu0 0.0
    %428 = vmatpush1.xpose.msra.mxu0 0.0
    %429 = vmatprep.subr.mxu0 0.0
    %430 = vmatpush1.xpose.msra.mxu0 0.0
    %431 = vmatprep.subr.mxu0 0.0
    %432 = vmatpush1.xpose.msra.mxu0 %v401
    %433 = vmatprep.subr.mxu0 0.0
    %434 = vmatpush1.xpose.msra.mxu0 %v398
    %435 = vmatprep.subr.mxu0 0.0
    %436 = vmatpush2.xpose.msra.mxu0 0.0
    %437 = vmatprep.subr.mxu0 0.0
    %438 = vmatpush2.xpose.msra.mxu0 0.0
    %439 = vmatprep.subr.mxu0 0.0
    %440 = vmatpush2.xpose.msra.mxu0 0.0
    %441 = vmatprep.subr.mxu0 0.0
    %442 = vmatpush2.xpose.msra.mxu0 0.0
    %443 = vmatprep.subr.mxu0 0.0
    %444 = vmatpush2.xpose.msra.mxu0 0.0
    %445 = vmatprep.subr.mxu0 0.0
    %446 = vmatpush2.xpose.msra.mxu0 0.0
    %447 = vmatprep.subr.mxu0 0.0
    %448 = vmatpush2.xpose.msra.mxu0 0.0
    %449 = vmatprep.subr.mxu0 0.0
    %450 = vmatpush2.xpose.msra.mxu0 0.0
    %451 = vmatprep.subr.mxu0 0.0
    %452 = vmatpush2.xpose.msra.mxu0 0.0
    %453 = vmatprep.subr.mxu0 0.0
    %454 = vmatpush2.xpose.msra.mxu0 0.0
    %455 = vmatprep.subr.mxu0 0.0
    %456 = vmatpush2.xpose.msra.mxu0 0.0
    %457 = vmatprep.subr.mxu0 0.0
    %458 = vmatpush2.xpose.msra.mxu0 0.0
    %459 = vmatprep.subr.mxu0 0.0
    %460 = vmatpush2.xpose.msra.mxu0 0.0
    %461 = vmatprep.subr.mxu0 0.0
    %462 = vmatpush2.xpose.msra.mxu0 0.0
    %463 = vmatprep.subr.mxu0 0.0
    %464 = vmatpush2.xpose.msra.mxu0 0.0
    %465 = vmatprep.subr.mxu0 0.0
    %466 = vmatpush2.xpose.msra.mxu0 0.0
    %467 = vmatprep.mubr.f32.mxu0 0.0
    %468 = vmatmul.mubr.f32.gmra.mxu0 %v395
    %v469 = vpop.f32.mrf.mxu0
    %v470 = vadd.f32 0.0, %v469
    %v471 = vpop.f32.mrf.mxu0
    %472 = vdwg.mxu0
    %v473 = vsel %vm124, %v470, -1e+30
    %vm474 = vcmask 123904
    %v475 = vsel %vm474, %v473, -inf
    %476 = vmax.xlane.f32.xlu0 %v475
    %v477 = vpop.xlane.xlu0 %476
    %v478 = vsub.f32 %v473, %v477
    %v479 = vmul.f32 %v478, 1.442695
    %v480 = vpow.pop %v479
    %v481 = vsel %vm474, %v480, 0.0
    %482 = vadd.xlane.f32.xlu0 %v481
    %v483 = vpop.xlane.xlu0 %482
    %v484 = vrcp.pop %v483
    %v485 = vmul.f32 %v480, %v484
    %v487 = vsel %vm41, %v485, 0
    %489 = vmatprep.subr.mxu0 0.0
    %490 = vmatpush1.msra.mxu0 0.0
    %491 = vmatprep.subr.mxu0 0.0
    %492 = vmatpush1.msra.mxu0 0.0
    %493 = vmatprep.subr.mxu0 0.0
    %494 = vmatpush1.msra.mxu0 0.0
    %495 = vmatprep.subr.mxu0 0.0
    %496 = vmatpush1.msra.mxu0 0.0
    %497 = vmatprep.subr.mxu0 0.0
    %498 = vmatpush1.msra.mxu0 0.0
    %499 = vmatprep.subr.mxu0 0.0
    %500 = vmatpush1.msra.mxu0 0.0
    %501 = vmatprep.subr.mxu0 0.0
    %502 = vmatpush1.msra.mxu0 0.0
    %503 = vmatprep.subr.mxu0 0.0
    %504 = vmatpush1.msra.mxu0 0.0
    %505 = vmatprep.subr.mxu0 0.0
    %506 = vmatpush1.msra.mxu0 0.0
    %507 = vmatprep.subr.mxu0 0.0
    %508 = vmatpush1.msra.mxu0 0.0
    %509 = vmatprep.subr.mxu0 0.0
    %510 = vmatpush1.msra.mxu0 0.0
    %511 = vmatprep.subr.mxu0 0.0
    %512 = vmatpush1.msra.mxu0 0.0
    %513 = vmatprep.subr.mxu0 0.0
    %514 = vmatpush1.msra.mxu0 0.0
    %515 = vmatprep.subr.mxu0 0.0
    %516 = vmatpush1.msra.mxu0 0.0
    %517 = vmatprep.subr.mxu0 0.0
    %518 = vmatpush1.msra.mxu0 %v391
    %519 = vmatprep.subr.mxu0 0.0
    %520 = vmatpush1.msra.mxu0 %v386
    %521 = vmatprep.subr.mxu0 0.0
    %522 = vmatpush2.msra.mxu0 0.0
    %523 = vmatprep.subr.mxu0 0.0
    %524 = vmatpush2.msra.mxu0 0.0
    %525 = vmatprep.subr.mxu0 0.0
    %526 = vmatpush2.msra.mxu0 0.0
    %527 = vmatprep.subr.mxu0 0.0
    %528 = vmatpush2.msra.mxu0 0.0
    %529 = vmatprep.subr.mxu0 0.0
    %530 = vmatpush2.msra.mxu0 0.0
    %531 = vmatprep.subr.mxu0 0.0
    %532 = vmatpush2.msra.mxu0 0.0
    %533 = vmatprep.subr.mxu0 0.0
    %534 = vmatpush2.msra.mxu0 0.0
    %535 = vmatprep.subr.mxu0 0.0
    %536 = vmatpush2.msra.mxu0 0.0
    %537 = vmatprep.subr.mxu0 0.0
    %538 = vmatpush2.msra.mxu0 0.0
    %539 = vmatprep.subr.mxu0 0.0
    %540 = vmatpush2.msra.mxu0 0.0
    %541 = vmatprep.subr.mxu0 0.0
    %542 = vmatpush2.msra.mxu0 0.0
    %543 = vmatprep.subr.mxu0 0.0
    %544 = vmatpush2.msra.mxu0 0.0
    %545 = vmatprep.subr.mxu0 0.0
    %546 = vmatpush2.msra.mxu0 0.0
    %547 = vmatprep.subr.mxu0 0.0
    %548 = vmatpush2.msra.mxu0 0.0
    %549 = vmatprep.subr.mxu0 0.0
    %550 = vmatpush2.msra.mxu0 0.0
    %551 = vmatprep.subr.mxu0 0.0
    %552 = vmatpush2.msra.mxu0 0.0
    %553 = vmatprep.mubr.f32.mxu0 0.0
    %554 = vmatmul.mubr.f32.gmra.mxu0 %v487
    %v555 = vpop.f32.mrf.mxu0
    %v556 = vadd.f32 0.0, %v555
    %v557 = vpop.f32.mrf.mxu0
    %558 = vdwg.mxu0
    %v559 = vld [vmem:[%s4] sm:$0xff]
    %v560 = vld [vmem:[%s4 + $0x8] sm:$0xff]
    %v561 = vld [vmem:[%s4 + $0x10] sm:$0xff]
    %v562 = vld [vmem:[%s4 + $0x18] sm:$0xff]
    %v564 = vsel %vm151, %v556, 0
    %566 = vmatprep.subr.mxu0 0.0
    %567 = vmatpush1.msra.mxu0 0.0
    %568 = vmatprep.subr.mxu0 0.0
    %569 = vmatpush1.msra.mxu0 0.0
    %570 = vmatprep.subr.mxu0 0.0
    %571 = vmatpush1.msra.mxu0 0.0
    %572 = vmatprep.subr.mxu0 0.0
    %573 = vmatpush1.msra.mxu0 0.0
    %574 = vmatprep.subr.mxu0 0.0
    %575 = vmatpush1.msra.mxu0 0.0
    %576 = vmatprep.subr.mxu0 0.0
    %577 = vmatpush1.msra.mxu0 0.0
    %578 = vmatprep.subr.mxu0 0.0
    %579 = vmatpush1.msra.mxu0 0.0
    %580 = vmatprep.subr.mxu0 0.0
    %581 = vmatpush1.msra.mxu0 0.0
    %582 = vmatprep.subr.mxu0 0.0
    %583 = vmatpush1.msra.mxu0 0.0
    %584 = vmatprep.subr.mxu0 0.0
    %585 = vmatpush1.msra.mxu0 0.0
    %586 = vmatprep.subr.mxu0 0.0
    %587 = vmatpush1.msra.mxu0 0.0
    %588 = vmatprep.subr.mxu0 0.0
    %589 = vmatpush1.msra.mxu0 0.0
    %590 = vmatprep.subr.mxu0 0.0
    %591 = vmatpush1.msra.mxu0 %v562
    %592 = vmatprep.subr.mxu0 0.0
    %593 = vmatpush1.msra.mxu0 %v561
    %594 = vmatprep.subr.mxu0 0.0
    %595 = vmatpush1.msra.mxu0 %v560
    %596 = vmatprep.subr.mxu0 0.0
    %597 = vmatpush1.msra.mxu0 %v559
    %598 = vmatprep.subr.mxu0 0.0
    %599 = vmatpush2.msra.mxu0 0.0
    %600 = vmatprep.subr.mxu0 0.0
    %601 = vmatpush2.msra.mxu0 0.0
    %602 = vmatprep.subr.mxu0 0.0
    %603 = vmatpush2.msra.mxu0 0.0
    %604 = vmatprep.subr.mxu0 0.0
    %605 = vmatpush2.msra.mxu0 0.0
    %606 = vmatprep.subr.mxu0 0.0
    %607 = vmatpush2.msra.mxu0 0.0
    %608 = vmatprep.subr.mxu0 0.0
    %609 = vmatpush2.msra.mxu0 0.0
    %610 = vmatprep.subr.mxu0 0.0
    %611 = vmatpush2.msra.mxu0 0.0
    %612 = vmatprep.subr.mxu0 0.0
    %613 = vmatpush2.msra.mxu0 0.0
    %614 = vmatprep.subr.mxu0 0.0
    %615 = vmatpush2.msra.mxu0 0.0
    %616 = vmatprep.subr.mxu0 0.0
    %617 = vmatpush2.msra.mxu0 0.0
    %618 = vmatprep.subr.mxu0 0.0
    %619 = vmatpush2.msra.mxu0 0.0
    %620 = vmatprep.subr.mxu0 0.0
    %621 = vmatpush2.msra.mxu0 0.0
    %622 = vmatprep.subr.mxu0 0.0
    %623 = vmatpush2.msra.mxu0 0.0
    %624 = vmatprep.subr.mxu0 0.0
    %625 = vmatpush2.msra.mxu0 0.0
    %626 = vmatprep.subr.mxu0 0.0
    %627 = vmatpush2.msra.mxu0 0.0
    %628 = vmatprep.subr.mxu0 0.0
    %629 = vmatpush2.msra.mxu0 0.0
    %630 = vmatprep.mubr.f32.mxu0 0.0
    %631 = vmatmul.mubr.f32.gmra.mxu0 %v564
    %v632 = vpop.f32.mrf.mxu0
    %v633 = vadd.f32 0.0, %v632
    %v634 = vpop.f32.mrf.mxu0
    %635 = vdwg.mxu0
    %v637 = vlaneseq
    %v638 = vshrl.u32 %v637, 7
    %v639 = vsub.s32 0, %v638
    %v640 = vrot.slane %v125, %v639
    %v642 = vadd.f32 %v640, %v633
    %s643 = scalar_lea.vmem [#allocation2], 32
    %v644 = vld [vmem:[%s643] sm:$0xff]
    %v645 = vld [vmem:[%s643 + $0x8] sm:$0xff]
    %v646 = vld [vmem:[%s643 + $0x10] sm:$0xff]
    %v647 = vld [vmem:[%s643 + $0x18] sm:$0xff]
    %s648 = scalar_lea.vmem %s3, 1
    %v649 = vld [vmem:[%s648] sm:$0x1]
    %s650 = scalar_lea.vmem [#allocation2], 96
    %v651 = vld [vmem:[%s650] sm:$0xff]
    %v652 = vld [vmem:[%s650 + $0x8] sm:$0xff]
    %v653 = vld [vmem:[%s650 + $0x10] sm:$0xff]
    %v654 = vld [vmem:[%s650 + $0x18] sm:$0xff]
    %s655 = scalar_lea.vmem %s3, 3
    %v656 = vld [vmem:[%s655] sm:$0x1]
    %s657 = scalar_lea.vmem [#allocation2], 160
    %v658 = vld [vmem:[%s657] sm:$0xff]
    %v659 = vld [vmem:[%s657 + $0x8] sm:$0xff]
    %v660 = vld [vmem:[%s657 + $0x10] sm:$0xff]
    %v661 = vld [vmem:[%s657 + $0x18] sm:$0xff]
    %s662 = scalar_lea.vmem %s3, 5
    %v663 = vld [vmem:[%s662] sm:$0x1]
    %v665 = vlaneseq
    %v666 = vshrl.u32 %v665, 7
    %v667 = vsub.s32 0, %v666
    %v668 = vrot.slane %v649, %v667
    %670 = vmatprep.subr.mxu0 0.0
    %671 = vmatpush1.msra.mxu0 0.0
    %672 = vmatprep.subr.mxu0 0.0
    %673 = vmatpush1.msra.mxu0 0.0
    %674 = vmatprep.subr.mxu0 0.0
    %675 = vmatpush1.msra.mxu0 0.0
    %676 = vmatprep.subr.mxu0 0.0
    %677 = vmatpush1.msra.mxu0 0.0
    %678 = vmatprep.subr.mxu0 0.0
    %679 = vmatpush1.msra.mxu0 0.0
    %680 = vmatprep.subr.mxu0 0.0
    %681 = vmatpush1.msra.mxu0 0.0
    %682 = vmatprep.subr.mxu0 0.0
    %683 = vmatpush1.msra.mxu0 0.0
    %684 = vmatprep.subr.mxu0 0.0
    %685 = vmatpush1.msra.mxu0 0.0
    %686 = vmatprep.subr.mxu0 0.0
    %687 = vmatpush1.msra.mxu0 0.0
    %688 = vmatprep.subr.mxu0 0.0
    %689 = vmatpush1.msra.mxu0 0.0
    %690 = vmatprep.subr.mxu0 0.0
    %691 = vmatpush1.msra.mxu0 0.0
    %692 = vmatprep.subr.mxu0 0.0
    %693 = vmatpush1.msra.mxu0 0.0
    %694 = vmatprep.subr.mxu0 0.0
    %695 = vmatpush1.msra.mxu0 %v647
    %696 = vmatprep.subr.mxu0 0.0
    %697 = vmatpush1.msra.mxu0 %v646
    %698 = vmatprep.subr.mxu0 0.0
    %699 = vmatpush1.msra.mxu0 %v645
    %700 = vmatprep.subr.mxu0 0.0
    %701 = vmatpush1.msra.mxu0 %v644
    %702 = vmatprep.subr.mxu0 0.0
    %703 = vmatpush2.msra.mxu0 0.0
    %704 = vmatprep.subr.mxu0 0.0
    %705 = vmatpush2.msra.mxu0 0.0
    %706 = vmatprep.subr.mxu0 0.0
    %707 = vmatpush2.msra.mxu0 0.0
    %708 = vmatprep.subr.mxu0 0.0
    %709 = vmatpush2.msra.mxu0 0.0
    %710 = vmatprep.subr.mxu0 0.0
    %711 = vmatpush2.msra.mxu0 0.0
    %712 = vmatprep.subr.mxu0 0.0
    %713 = vmatpush2.msra.mxu0 0.0
    %714 = vmatprep.subr.mxu0 0.0
    %715 = vmatpush2.msra.mxu0 0.0
    %716 = vmatprep.subr.mxu0 0.0
    %717 = vmatpush2.msra.mxu0 0.0
    %718 = vmatprep.subr.mxu0 0.0
    %719 = vmatpush2.msra.mxu0 0.0
    %720 = vmatprep.subr.mxu0 0.0
    %721 = vmatpush2.msra.mxu0 0.0
    %722 = vmatprep.subr.mxu0 0.0
    %723 = vmatpush2.msra.mxu0 0.0
    %724 = vmatprep.subr.mxu0 0.0
    %725 = vmatpush2.msra.mxu0 0.0
    %726 = vmatprep.subr.mxu0 0.0
    %727 = vmatpush2.msra.mxu0 0.0
    %728 = vmatprep.subr.mxu0 0.0
    %729 = vmatpush2.msra.mxu0 0.0
    %730 = vmatprep.subr.mxu0 0.0
    %731 = vmatpush2.msra.mxu0 0.0
    %732 = vmatprep.subr.mxu0 0.0
    %733 = vmatpush2.msra.mxu0 0.0
    %734 = vmatprep.mubr.f32.mxu0 0.0
    %735 = vmatmul.mubr.f32.gmra.mxu0 %v153
    %v736 = vpop.f32.mrf.mxu0
    %v737 = vadd.f32 %v668, %v736
    %v738 = vpop.f32.mrf.mxu0
    %739 = vdwg.mxu0
    %v740 = vmul.f32 %v737, 0.17677669
    %v742 = vlaneseq
    %v743 = vshrl.u32 %v742, 7
    %v744 = vsub.s32 0, %v743
    %v745 = vrot.slane %v656, %v744
    %747 = vmatprep.subr.mxu0 0.0
    %748 = vmatpush1.msra.mxu0 0.0
    %749 = vmatprep.subr.mxu0 0.0
    %750 = vmatpush1.msra.mxu0 0.0
    %751 = vmatprep.subr.mxu0 0.0
    %752 = vmatpush1.msra.mxu0 0.0
    %753 = vmatprep.subr.mxu0 0.0
    %754 = vmatpush1.msra.mxu0 0.0
    %755 = vmatprep.subr.mxu0 0.0
    %756 = vmatpush1.msra.mxu0 0.0
    %757 = vmatprep.subr.mxu0 0.0
    %758 = vmatpush1.msra.mxu0 0.0
    %759 = vmatprep.subr.mxu0 0.0
    %760 = vmatpush1.msra.mxu0 0.0
    %761 = vmatprep.subr.mxu0 0.0
    %762 = vmatpush1.msra.mxu0 0.0
    %763 = vmatprep.subr.mxu0 0.0
    %764 = vmatpush1.msra.mxu0 0.0
    %765 = vmatprep.subr.mxu0 0.0
    %766 = vmatpush1.msra.mxu0 0.0
    %767 = vmatprep.subr.mxu0 0.0
    %768 = vmatpush1.msra.mxu0 0.0
    %769 = vmatprep.subr.mxu0 0.0
    %770 = vmatpush1.msra.mxu0 0.0
    %771 = vmatprep.subr.mxu0 0.0
    %772 = vmatpush1.msra.mxu0 %v654
    %773 = vmatprep.subr.mxu0 0.0
    %774 = vmatpush1.msra.mxu0 %v653
    %775 = vmatprep.subr.mxu0 0.0
    %776 = vmatpush1.msra.mxu0 %v652
    %777 = vmatprep.subr.mxu0 0.0
    %778 = vmatpush1.msra.mxu0 %v651
    %779 = vmatprep.subr.mxu0 0.0
    %780 = vmatpush2.msra.mxu0 0.0
    %781 = vmatprep.subr.mxu0 0.0
    %782 = vmatpush2.msra.mxu0 0.0
    %783 = vmatprep.subr.mxu0 0.0
    %784 = vmatpush2.msra.mxu0 0.0
    %785 = vmatprep.subr.mxu0 0.0
    %786 = vmatpush2.msra.mxu0 0.0
    %787 = vmatprep.subr.mxu0 0.0
    %788 = vmatpush2.msra.mxu0 0.0
    %789 = vmatprep.subr.mxu0 0.0
    %790 = vmatpush2.msra.mxu0 0.0
    %791 = vmatprep.subr.mxu0 0.0
    %792 = vmatpush2.msra.mxu0 0.0
    %793 = vmatprep.subr.mxu0 0.0
    %794 = vmatpush2.msra.mxu0 0.0
    %795 = vmatprep.subr.mxu0 0.0
    %796 = vmatpush2.msra.mxu0 0.0
    %797 = vmatprep.subr.mxu0 0.0
    %798 = vmatpush2.msra.mxu0 0.0
    %799 = vmatprep.subr.mxu0 0.0
    %800 = vmatpush2.msra.mxu0 0.0
    %801 = vmatprep.subr.mxu0 0.0
    %802 = vmatpush2.msra.mxu0 0.0
    %803 = vmatprep.subr.mxu0 0.0
    %804 = vmatpush2.msra.mxu0 0.0
    %805 = vmatprep.subr.mxu0 0.0
    %806 = vmatpush2.msra.mxu0 0.0
    %807 = vmatprep.subr.mxu0 0.0
    %808 = vmatpush2.msra.mxu0 0.0
    %809 = vmatprep.subr.mxu0 0.0
    %810 = vmatpush2.msra.mxu0 0.0
    %811 = vmatprep.mubr.f32.mxu0 0.0
    %812 = vmatmul.mubr.f32.gmra.mxu0 %v233
    %v813 = vpop.f32.mrf.mxu0
    %v814 = vadd.f32 %v745, %v813
    %v815 = vpop.f32.mrf.mxu0
    %816 = vmatprep.mubr.f32.mxu0 0.0
    %817 = vmatmul.mubr.f32.gmra.mxu0 %v236
    %v818 = vpop.f32.mrf.mxu0
    %v819 = vadd.f32 %v745, %v818
    %v820 = vpop.f32.mrf.mxu0
    %821 = vdwg.mxu0
    %v823 = vlaneseq
    %v824 = vshrl.u32 %v823, 7
    %v825 = vsub.s32 0, %v824
    %v826 = vrot.slane %v663, %v825
    %828 = vmatprep.subr.mxu0 0.0
    %829 = vmatpush1.msra.mxu0 0.0
    %830 = vmatprep.subr.mxu0 0.0
    %831 = vmatpush1.msra.mxu0 0.0
    %832 = vmatprep.subr.mxu0 0.0
    %833 = vmatpush1.msra.mxu0 0.0
    %834 = vmatprep.subr.mxu0 0.0
    %835 = vmatpush1.msra.mxu0 0.0
    %836 = vmatprep.subr.mxu0 0.0
    %837 = vmatpush1.msra.mxu0 0.0
    %838 = vmatprep.subr.mxu0 0.0
    %839 = vmatpush1.msra.mxu0 0.0
    %840 = vmatprep.subr.mxu0 0.0
    %841 = vmatpush1.msra.mxu0 0.0
    %842 = vmatprep.subr.mxu0 0.0
    %843 = vmatpush1.msra.mxu0 0.0
    %844 = vmatprep.subr.mxu0 0.0
    %845 = vmatpush1.msra.mxu0 0.0
    %846 = vmatprep.subr.mxu0 0.0
    %847 = vmatpush1.msra.mxu0 0.0
    %848 = vmatprep.subr.mxu0 0.0
    %849 = vmatpush1.msra.mxu0 0.0
    %850 = vmatprep.subr.mxu0 0.0
    %851 = vmatpush1.msra.mxu0 0.0
    %852 = vmatprep.subr.mxu0 0.0
    %853 = vmatpush1.msra.mxu0 %v661
    %854 = vmatprep.subr.mxu0 0.0
    %855 = vmatpush1.msra.mxu0 %v660
    %856 = vmatprep.subr.mxu0 0.0
    %857 = vmatpush1.msra.mxu0 %v659
    %858 = vmatprep.subr.mxu0 0.0
    %859 = vmatpush1.msra.mxu0 %v658
    %860 = vmatprep.subr.mxu0 0.0
    %861 = vmatpush2.msra.mxu0 0.0
    %862 = vmatprep.subr.mxu0 0.0
    %863 = vmatpush2.msra.mxu0 0.0
    %864 = vmatprep.subr.mxu0 0.0
    %865 = vmatpush2.msra.mxu0 0.0
    %866 = vmatprep.subr.mxu0 0.0
    %867 = vmatpush2.msra.mxu0 0.0
    %868 = vmatprep.subr.mxu0 0.0
    %869 = vmatpush2.msra.mxu0 0.0
    %870 = vmatprep.subr.mxu0 0.0
    %871 = vmatpush2.msra.mxu0 0.0
    %872 = vmatprep.subr.mxu0 0.0
    %873 = vmatpush2.msra.mxu0 0.0
    %874 = vmatprep.subr.mxu0 0.0
    %875 = vmatpush2.msra.mxu0 0.0
    %876 = vmatprep.subr.mxu0 0.0
    %877 = vmatpush2.msra.mxu0 0.0
    %878 = vmatprep.subr.mxu0 0.0
    %879 = vmatpush2.msra.mxu0 0.0
    %880 = vmatprep.subr.mxu0 0.0
    %881 = vmatpush2.msra.mxu0 0.0
    %882 = vmatprep.subr.mxu0 0.0
    %883 = vmatpush2.msra.mxu0 0.0
    %884 = vmatprep.subr.mxu0 0.0
    %885 = vmatpush2.msra.mxu0 0.0
    %886 = vmatprep.subr.mxu0 0.0
    %887 = vmatpush2.msra.mxu0 0.0
    %888 = vmatprep.subr.mxu0 0.0
    %889 = vmatpush2.msra.mxu0 0.0
    %890 = vmatprep.subr.mxu0 0.0
    %891 = vmatpush2.msra.mxu0 0.0
    %892 = vmatprep.mubr.f32.mxu0 0.0
    %893 = vmatmul.mubr.f32.gmra.mxu0 %v233
    %v894 = vpop.f32.mrf.mxu0
    %v895 = vadd.f32 %v826, %v894
    %v896 = vpop.f32.mrf.mxu0
    %897 = vmatprep.mubr.f32.mxu0 0.0
    %898 = vmatmul.mubr.f32.gmra.mxu0 %v236
    %v899 = vpop.f32.mrf.mxu0
    %v900 = vadd.f32 %v826, %v899
    %v901 = vpop.f32.mrf.mxu0
    %902 = vdwg.mxu0
    %v904 = vsel %vm151, %v740, 0
    %v907 = vsel %vm151, %v814, 0
    %v910 = vsel %vm151, %v819, 0
    %912 = vmatprep.subr.mxu0 0.0
    %913 = vmatpush1.xpose.msra.mxu0 0.0
    %914 = vmatprep.subr.mxu0 0.0
    %915 = vmatpush1.xpose.msra.mxu0 0.0
    %916 = vmatprep.subr.mxu0 0.0
    %917 = vmatpush1.xpose.msra.mxu0 0.0
    %918 = vmatprep.subr.mxu0 0.0
    %919 = vmatpush1.xpose.msra.mxu0 0.0
    %920 = vmatprep.subr.mxu0 0.0
    %921 = vmatpush1.xpose.msra.mxu0 0.0
    %922 = vmatprep.subr.mxu0 0.0
    %923 = vmatpush1.xpose.msra.mxu0 0.0
    %924 = vmatprep.subr.mxu0 0.0
    %925 = vmatpush1.xpose.msra.mxu0 0.0
    %926 = vmatprep.subr.mxu0 0.0
    %927 = vmatpush1.xpose.msra.mxu0 0.0
    %928 = vmatprep.subr.mxu0 0.0
    %929 = vmatpush1.xpose.msra.mxu0 0.0
    %930 = vmatprep.subr.mxu0 0.0
    %931 = vmatpush1.xpose.msra.mxu0 0.0
    %932 = vmatprep.subr.mxu0 0.0
    %933 = vmatpush1.xpose.msra.mxu0 0.0
    %934 = vmatprep.subr.mxu0 0.0
    %935 = vmatpush1.xpose.msra.mxu0 0.0
    %936 = vmatprep.subr.mxu0 0.0
    %937 = vmatpush1.xpose.msra.mxu0 0.0
    %938 = vmatprep.subr.mxu0 0.0
    %939 = vmatpush1.xpose.msra.mxu0 0.0
    %940 = vmatprep.subr.mxu0 0.0
    %941 = vmatpush1.xpose.msra.mxu0 %v910
    %942 = vmatprep.subr.mxu0 0.0
    %943 = vmatpush1.xpose.msra.mxu0 %v907
    %944 = vmatprep.subr.mxu0 0.0
    %945 = vmatpush2.xpose.msra.mxu0 0.0
    %946 = vmatprep.subr.mxu0 0.0
    %947 = vmatpush2.xpose.msra.mxu0 0.0
    %948 = vmatprep.subr.mxu0 0.0
    %949 = vmatpush2.xpose.msra.mxu0 0.0
    %950 = vmatprep.subr.mxu0 0.0
    %951 = vmatpush2.xpose.msra.mxu0 0.0
    %952 = vmatprep.subr.mxu0 0.0
    %953 = vmatpush2.xpose.msra.mxu0 0.0
    %954 = vmatprep.subr.mxu0 0.0
    %955 = vmatpush2.xpose.msra.mxu0 0.0
    %956 = vmatprep.subr.mxu0 0.0
    %957 = vmatpush2.xpose.msra.mxu0 0.0
    %958 = vmatprep.subr.mxu0 0.0
    %959 = vmatpush2.xpose.msra.mxu0 0.0
    %960 = vmatprep.subr.mxu0 0.0
    %961 = vmatpush2.xpose.msra.mxu0 0.0
    %962 = vmatprep.subr.mxu0 0.0
    %963 = vmatpush2.xpose.msra.mxu0 0.0
    %964 = vmatprep.subr.mxu0 0.0
    %965 = vmatpush2.xpose.msra.mxu0 0.0
    %966 = vmatprep.subr.mxu0 0.0
    %967 = vmatpush2.xpose.msra.mxu0 0.0
    %968 = vmatprep.subr.mxu0 0.0
    %969 = vmatpush2.xpose.msra.mxu0 0.0
    %970 = vmatprep.subr.mxu0 0.0
    %971 = vmatpush2.xpose.msra.mxu0 0.0
    %972 = vmatprep.subr.mxu0 0.0
    %973 = vmatpush2.xpose.msra.mxu0 0.0
    %974 = vmatprep.subr.mxu0 0.0
    %975 = vmatpush2.xpose.msra.mxu0 0.0
    %976 = vmatprep.mubr.f32.mxu0 0.0
    %977 = vmatmul.mubr.f32.gmra.mxu0 %v904
    %v978 = vpop.f32.mrf.mxu0
    %v979 = vadd.f32 0.0, %v978
    %v980 = vpop.f32.mrf.mxu0
    %981 = vdwg.mxu0
    %v982 = vsel %vm124, %v979, -1e+30
    %v983 = vsel %vm474, %v982, -inf
    %984 = vmax.xlane.f32.xlu0 %v983
    %v985 = vpop.xlane.xlu0 %984
    %v986 = vsub.f32 %v982, %v985
    %v987 = vmul.f32 %v986, 1.442695
    %v988 = vpow.pop %v987
    %v989 = vsel %vm474, %v988, 0.0
    %990 = vadd.xlane.f32.xlu0 %v989
    %v991 = vpop.xlane.xlu0 %990
    %v992 = vrcp.pop %v991
    %v993 = vmul.f32 %v988, %v992
    %v995 = vsel %vm41, %v993, 0
    %997 = vmatprep.subr.mxu0 0.0
    %998 = vmatpush1.msra.mxu0 0.0
    %999 = vmatprep.subr.mxu0 0.0
    %1000 = vmatpush1.msra.mxu0 0.0
    %1001 = vmatprep.subr.mxu0 0.0
    %1002 = vmatpush1.msra.mxu0 0.0
    %1003 = vmatprep.subr.mxu0 0.0
    %1004 = vmatpush1.msra.mxu0 0.0
    %1005 = vmatprep.subr.mxu0 0.0
    %1006 = vmatpush1.msra.mxu0 0.0
    %1007 = vmatprep.subr.mxu0 0.0
    %1008 = vmatpush1.msra.mxu0 0.0
    %1009 = vmatprep.subr.mxu0 0.0
    %1010 = vmatpush1.msra.mxu0 0.0
    %1011 = vmatprep.subr.mxu0 0.0
    %1012 = vmatpush1.msra.mxu0 0.0
    %1013 = vmatprep.subr.mxu0 0.0
    %1014 = vmatpush1.msra.mxu0 0.0
    %1015 = vmatprep.subr.mxu0 0.0
    %1016 = vmatpush1.msra.mxu0 0.0
    %1017 = vmatprep.subr.mxu0 0.0
    %1018 = vmatpush1.msra.mxu0 0.0
    %1019 = vmatprep.subr.mxu0 0.0
    %1020 = vmatpush1.msra.mxu0 0.0
    %1021 = vmatprep.subr.mxu0 0.0
    %1022 = vmatpush1.msra.mxu0 0.0
    %1023 = vmatprep.subr.mxu0 0.0
    %1024 = vmatpush1.msra.mxu0 0.0
    %1025 = vmatprep.subr.mxu0 0.0
    %1026 = vmatpush1.msra.mxu0 %v900
    %1027 = vmatprep.subr.mxu0 0.0
    %1028 = vmatpush1.msra.mxu0 %v895
    %1029 = vmatprep.subr.mxu0 0.0
    %1030 = vmatpush2.msra.mxu0 0.0
    %1031 = vmatprep.subr.mxu0 0.0
    %1032 = vmatpush2.msra.mxu0 0.0
    %1033 = vmatprep.subr.mxu0 0.0
    %1034 = vmatpush2.msra.mxu0 0.0
    %1035 = vmatprep.subr.mxu0 0.0
    %1036 = vmatpush2.msra.mxu0 0.0
    %1037 = vmatprep.subr.mxu0 0.0
    %1038 = vmatpush2.msra.mxu0 0.0
    %1039 = vmatprep.subr.mxu0 0.0
    %1040 = vmatpush2.msra.mxu0 0.0
    %1041 = vmatprep.subr.mxu0 0.0
    %1042 = vmatpush2.msra.mxu0 0.0
    %1043 = vmatprep.subr.mxu0 0.0
    %1044 = vmatpush2.msra.mxu0 0.0
    %1045 = vmatprep.subr.mxu0 0.0
    %1046 = vmatpush2.msra.mxu0 0.0
    %1047 = vmatprep.subr.mxu0 0.0
    %1048 = vmatpush2.msra.mxu0 0.0
    %1049 = vmatprep.subr.mxu0 0.0
    %1050 = vmatpush2.msra.mxu0 0.0
    %1051 = vmatprep.subr.mxu0 0.0
    %1052 = vmatpush2.msra.mxu0 0.0
    %1053 = vmatprep.subr.mxu0 0.0
    %1054 = vmatpush2.msra.mxu0 0.0
    %1055 = vmatprep.subr.mxu0 0.0
    %1056 = vmatpush2.msra.mxu0 0.0
    %1057 = vmatprep.subr.mxu0 0.0
    %1058 = vmatpush2.msra.mxu0 0.0
    %1059 = vmatprep.subr.mxu0 0.0
    %1060 = vmatpush2.msra.mxu0 0.0
    %1061 = vmatprep.mubr.f32.mxu0 0.0
    %1062 = vmatmul.mubr.f32.gmra.mxu0 %v995
    %v1063 = vpop.f32.mrf.mxu0
    %v1064 = vadd.f32 0.0, %v1063
    %v1065 = vpop.f32.mrf.mxu0
    %1066 = vdwg.mxu0
    %s1067 = scalar_lea.vmem %s4, 32
    %v1068 = vld [vmem:[%s1067] sm:$0xff]
    %v1069 = vld [vmem:[%s1067 + $0x8] sm:$0xff]
    %v1070 = vld [vmem:[%s1067 + $0x10] sm:$0xff]
    %v1071 = vld [vmem:[%s1067 + $0x18] sm:$0xff]
    %v1073 = vsel %vm151, %v1064, 0
    %1075 = vmatprep.subr.mxu0 0.0
    %1076 = vmatpush1.msra.mxu0 0.0
    %1077 = vmatprep.subr.mxu0 0.0
    %1078 = vmatpush1.msra.mxu0 0.0
    %1079 = vmatprep.subr.mxu0 0.0
    %1080 = vmatpush1.msra.mxu0 0.0
    %1081 = vmatprep.subr.mxu0 0.0
    %1082 = vmatpush1.msra.mxu0 0.0
    %1083 = vmatprep.subr.mxu0 0.0
    %1084 = vmatpush1.msra.mxu0 0.0
    %1085 = vmatprep.subr.mxu0 0.0
    %1086 = vmatpush1.msra.mxu0 0.0
    %1087 = vmatprep.subr.mxu0 0.0
    %1088 = vmatpush1.msra.mxu0 0.0
    %1089 = vmatprep.subr.mxu0 0.0
    %1090 = vmatpush1.msra.mxu0 0.0
    %1091 = vmatprep.subr.mxu0 0.0
    %1092 = vmatpush1.msra.mxu0 0.0
    %1093 = vmatprep.subr.mxu0 0.0
    %1094 = vmatpush1.msra.mxu0 0.0
    %1095 = vmatprep.subr.mxu0 0.0
    %1096 = vmatpush1.msra.mxu0 0.0
    %1097 = vmatprep.subr.mxu0 0.0
    %1098 = vmatpush1.msra.mxu0 0.0
    %1099 = vmatprep.subr.mxu0 0.0
    %1100 = vmatpush1.msra.mxu0 %v1071
    %1101 = vmatprep.subr.mxu0 0.0
    %1102 = vmatpush1.msra.mxu0 %v1070
    %1103 = vmatprep.subr.mxu0 0.0
    %1104 = vmatpush1.msra.mxu0 %v1069
    %1105 = vmatprep.subr.mxu0 0.0
    %1106 = vmatpush1.msra.mxu0 %v1068
    %1107 = vmatprep.subr.mxu0 0.0
    %1108 = vmatpush2.msra.mxu0 0.0
    %1109 = vmatprep.subr.mxu0 0.0
    %1110 = vmatpush2.msra.mxu0 0.0
    %1111 = vmatprep.subr.mxu0 0.0
    %1112 = vmatpush2.msra.mxu0 0.0
    %1113 = vmatprep.subr.mxu0 0.0
    %1114 = vmatpush2.msra.mxu0 0.0
    %1115 = vmatprep.subr.mxu0 0.0
    %1116 = vmatpush2.msra.mxu0 0.0
    %1117 = vmatprep.subr.mxu0 0.0
    %1118 = vmatpush2.msra.mxu0 0.0
    %1119 = vmatprep.subr.mxu0 0.0
    %1120 = vmatpush2.msra.mxu0 0.0
    %1121 = vmatprep.subr.mxu0 0.0
    %1122 = vmatpush2.msra.mxu0 0.0
    %1123 = vmatprep.subr.mxu0 0.0
    %1124 = vmatpush2.msra.mxu0 0.0
    %1125 = vmatprep.subr.mxu0 0.0
    %1126 = vmatpush2.msra.mxu0 0.0
    %1127 = vmatprep.subr.mxu0 0.0
    %1128 = vmatpush2.msra.mxu0 0.0
    %1129 = vmatprep.subr.mxu0 0.0
    %1130 = vmatpush2.msra.mxu0 0.0
    %1131 = vmatprep.subr.mxu0 0.0
    %1132 = vmatpush2.msra.mxu0 0.0
    %1133 = vmatprep.subr.mxu0 0.0
    %1134 = vmatpush2.msra.mxu0 0.0
    %1135 = vmatprep.subr.mxu0 0.0
    %1136 = vmatpush2.msra.mxu0 0.0
    %1137 = vmatprep.subr.mxu0 0.0
    %1138 = vmatpush2.msra.mxu0 0.0
    %1139 = vmatprep.mubr.f32.mxu0 0.0
    %1140 = vmatmul.mubr.f32.gmra.mxu0 %v1073
    %v1141 = vpop.f32.mrf.mxu0
    %v1142 = vadd.f32 0.0, %v1141
    %v1143 = vpop.f32.mrf.mxu0
    %1144 = vdwg.mxu0
    %v1145 = vadd.f32 %v642, %v1142
    %vm1146 = vcmask 58368
    %1147 = vst.msk [vmem:[#allocation5] sm:$0x3] %vm1146, %v1145
    // Predicated region
    $region30: #{tpu_custom_call.1} parent=1 // pred_check
      _
    $region31: #{tpu_custom_call.1} parent=1 // pred_check_branch
      %1149 = sbr.rel (0) target = $region33
    $region32: #{tpu_custom_call.1} parent=1 // pred_region
      %s1151 = ssub.s32 32, 32
      %1152 = vsyncadd [#allocation4], %s1151
      %s1154 = sshll.u32 [#allocation5], 4
      %s1155 = int_to_ptr.vmem [resolvable:$true] %s1154
      %1157 = dma.vmem_to_hbm [thread:$0]  %s1155, 32, %s6, [#allocation4]
    $region33: #{tpu_custom_call.1} parent=1 // pred_fallthru
      _
    // Predicated region
    $region34: #{tpu_custom_call.1} parent=1 // pred_check
      _
    $region35: #{tpu_custom_call.1} parent=1 // pred_check_branch
      %1159 = sbr.rel (0) target = $region37
    $region36: #{tpu_custom_call.1} parent=1 // pred_region
      %1160 = dma.done [#allocation4], 32
    $region37: #{tpu_custom_call.1} parent=1 // pred_fallthru
      _
    %1161 = vsyncpa [#allocation3], 1
    %1162 = vsyncpa [#allocation4], 1

</llo_original>
